<compile_context>
chip_gen: v6e
topology: v6e:2x2x1
jax: 0.10.0
libtpu: 0.0.40
codegen_flags: <defaults>
</compile_context>

<pallas_src>
import jax
import jax.numpy as jnp
from jax.experimental import pallas as pl
from jax.experimental.pallas import tpu as pltpu


# ------------------------------- kernels ----------------------------------- #

def _mlp_kernel_single(x_ref, w1_ref, b1_ref, w2_ref, b2_ref, o_ref):
    # Whole hidden dim resident in one tile: fully fused, no scratch.
    # x:(tn,C_p) w1:(C_p,H_p) b1:(1,H_p)f32 w2:(H_p,O_p) b2:(1,O_p)f32
    h = jnp.dot(x_ref[...], w1_ref[...], preferred_element_type=jnp.float32)
    h = jnp.maximum(h + b1_ref[...], 0.0)
    y = jnp.dot(h.astype(w2_ref.dtype), w2_ref[...],
                preferred_element_type=jnp.float32)
    o_ref[...] = (y + b2_ref[...]).astype(o_ref.dtype)


def _mlp_kernel_tiled(x_ref, w1_ref, b1_ref, w2_ref, b2_ref, o_ref, acc_ref):
    # Hidden dim tiled along grid axis 1 (reduction, "arbitrary", last).
    # acc_ref: (tn, O_p) f32, resident across the hidden axis.
    k = pl.program_id(1)

    h = jnp.dot(x_ref[...], w1_ref[...], preferred_element_type=jnp.float32)
    h = jnp.maximum(h + b1_ref[...], 0.0)
    partial = jnp.dot(h.astype(w2_ref.dtype), w2_ref[...],
                      preferred_element_type=jnp.float32)

    @pl.when(k == 0)
    def _init():
        # First partial written directly with b2 folded in: no zero-init pass
        # and no separate finalize add.
        acc_ref[...] = partial + b2_ref[...]

    @pl.when(k != 0)
    def _accum():
        acc_ref[...] += partial

    @pl.when(k == pl.num_programs(1) - 1)
    def _finalize():
        o_ref[...] = acc_ref[...].astype(o_ref.dtype)


# ------------------------------ wrapper ------------------------------------ #

_LANE = 128


def _round_up(x, m):
    return (x + m - 1) // m * m


def _pad2d(a, rows, cols, dtype):
    a = a.astype(dtype)
    if a.shape == (rows, cols):
        return a
    return jnp.zeros((rows, cols), dtype).at[:a.shape[0], :a.shape[1]].set(a)


def _chip_config():
    """Generation-dependent tiling / VMEM defaults (v5e / v6e / v7x)."""
    vmem_cap = 128 * 1024 * 1024
    try:
        vmem_cap = int(pltpu.get_tpu_info().vmem_capacity_bytes)
    except Exception:
        pass
    kind = ""
    try:
        kind = jax.devices()[0].device_kind.lower()
    except Exception:
        pass

    if vmem_cap <= 64 * 1024 * 1024 or "v7" in kind:
        # v7x: 64 MiB VMEM / TC, 2 TCs/chip, 2x256x256 MXU.
        return dict(token_tile=512, hidden_cap=512, align=256,
                    vmem_limit=52 * 1024 * 1024,
                    vmem_budget=46 * 1024 * 1024, two_cores=True)
    if "v5" in kind:
        # v5e: 128 MiB VMEM, 4x128x128 MXU, worst FLOPs/HBM-byte ratio.
        return dict(token_tile=1024, hidden_cap=1024, align=128,
                    vmem_limit=100 * 1024 * 1024,
                    vmem_budget=88 * 1024 * 1024, two_cores=False)
    # v6e (default): 128 MiB VMEM, 2x256x256 MXU, most HBM-exposed chip.
    return dict(token_tile=1024, hidden_cap=1024, align=256,
                vmem_limit=100 * 1024 * 1024,
                vmem_budget=88 * 1024 * 1024, two_cores=False)


def _pick_hidden_tile(h_aligned, cap, align):
    """Tile (multiple of `align`, <= cap) minimizing padded hidden size;
    ties prefer the larger tile (fewer reduction steps)."""
    if h_aligned <= cap:
        return h_aligned
    best_t, best_pad = align, _round_up(h_aligned, align)
    t = align
    while t <= cap:
        pad = _round_up(h_aligned, t)
        if pad < best_pad or (pad == best_pad and t > best_t):
            best_t, best_pad = t, pad
        t += align
    return best_t


def _vmem_bytes(tn, th, c_p, o_p, kt, in_isize, out_isize):
    """Rough working-set estimate for the pipelined blocks."""
    acc = tn * o_p * 4
    x_blk = 2 * tn * c_p * in_isize
    o_blk = 2 * tn * o_p * out_isize
    nbuf = 1 if kt == 1 else 2
    w1 = nbuf * c_p * th * in_isize
    w2 = nbuf * th * o_p * in_isize
    b1 = nbuf * th * 4
    b2 = o_p * 4
    return acc + x_blk + o_blk + w1 + w2 + b1 + b2


def mlp_forward(x, w1, b1, w2, b2, *, token_tile=None, hidden_tile=None,
                vmem_limit_bytes=None, weight_buffers=None):
    """x: (..., in_features) -> (..., out_features).

    w1: (in, hidden), b1: (hidden,) or (1, hidden)
    w2: (hidden, out), b2: (out,) or (1, out)
    """
    cfg = _chip_config()
    token_tile = token_tile or cfg["token_tile"]
    hidden_cap = hidden_tile or cfg["hidden_cap"]
    align = cfg["align"]
    vmem_limit = vmem_limit_bytes or cfg["vmem_limit"]
    vmem_budget = min(cfg["vmem_budget"], vmem_limit)

    C = x.shape[-1]
    H = w1.shape[1]
    O = w2.shape[1]
    lead = x.shape[:-1]
    out_dtype = x.dtype

    # Guarantee narrow MXU operands (bf16) with f32 accumulation in-kernel.
    compute_dtype = jnp.bfloat16 if x.dtype == jnp.float32 else x.dtype
    in_isize = jnp.dtype(compute_dtype).itemsize
    out_isize = jnp.dtype(out_dtype).itemsize

    x2 = x.reshape(-1, C)
    N = x2.shape[0]

    # Lane-dense / MXU-friendly feature dims.
    C_p = _round_up(C, align)
    O_p = _round_up(O, align)
    H_a = _round_up(H, align)

    # Token tile (multiple of the sublane packing), capped by padded N.
    sub = 16 if in_isize <= 2 else 8
    N_sub = _round_up(N, sub)
    tn = max(sub, min(_round_up(token_tile, sub), N_sub))
    # v7x megacore: make sure there are >= 2 token tiles to shard across TCs.
    if cfg["two_cores"] and N_sub >= 2 * sub and N_sub // tn < 2:
        tn = _round_up(pl.cdiv(N_sub, 2), sub)

    # Hidden tile: pad H up to the tile instead of shrinking the tile.
    th = _pick_hidden_tile(H_a, max(_round_up(hidden_cap, align), align), align)
    H_p = _round_up(H_a, th)
    kt = H_p // th

    # Shrink tiles (hidden first, then tokens) to fit the per-core VMEM budget.
    while _vmem_bytes(tn, th, C_p, O_p, kt, in_isize, out_isize) > vmem_budget:
        if th > align:
            th = max(align, _round_up(th // 2, align))
            H_p = _round_up(H_a, th)
            kt = H_p // th
        elif tn > sub:
            tn = max(sub, _round_up(tn // 2, sub))
        else:
            break

    N_p = _round_up(N, tn)
    nt = N_p // tn

    # Zero-pad operands (exact: padded b1/w1 cols give ReLU(0)=0, padded w2
    # rows/cols contribute 0; extra output cols / token rows sliced off).
    xp = _pad2d(x2, N_p, C_p, compute_dtype)
    w1p = _pad2d(w1, C_p, H_p, compute_dtype)
    w2p = _pad2d(w2, H_p, O_p, compute_dtype)
    # Biases pre-cast to f32 so no per-step casts inside the kernel.
    b1p = _pad2d(b1.reshape(1, -1), 1, H_p, jnp.float32)
    b2p = _pad2d(b2.reshape(1, -1), 1, O_p, jnp.float32)

    weights_const = (kt == 1)   # weight index maps constant across whole grid

    def _wspec(shape, index_map):
        if weights_const:
            # Constant blocks gain nothing from double-buffering.
            return pl.BlockSpec(shape, index_map, pipeline_mode=pl.Buffered(1))
        if weight_buffers is not None and weight_buffers != 2:
            return pl.BlockSpec(shape, index_map,
                                pipeline_mode=pl.Buffered(weight_buffers))
        return pl.BlockSpec(shape, index_map)

    in_specs = [
        pl.BlockSpec((tn, C_p), lambda i, k: (i, 0)),
        _wspec((C_p, th), lambda i, k: (0, k)),
        _wspec((1, th), lambda i, k: (0, k)),
        _wspec((th, O_p), lambda i, k: (k, 0)),
        pl.BlockSpec((1, O_p), lambda i, k: (0, 0),
                     pipeline_mode=pl.Buffered(1)),
    ]
    out_spec = pl.BlockSpec((tn, O_p), lambda i, k: (i, 0))

    if kt == 1:
        kernel = _mlp_kernel_single
        scratch = []
    else:
        kernel = _mlp_kernel_tiled
        scratch = [pltpu.VMEM((tn, O_p), jnp.float32)]

    # Real HBM traffic: weights re-streamed once per token tile.
    out_bytes = N_p * O_p * out_isize
    cost = pl.CostEstimate(
        flops=2 * N_p * (C_p * H_p + H_p * O_p),
        transcendentals=0,
        bytes_accessed=(xp.nbytes + out_bytes
                        + nt * (w1p.nbytes + b1p.nbytes
                                + w2p.nbytes + b2p.nbytes)),
    )

    out = pl.pallas_call(
        kernel,
        out_shape=jax.ShapeDtypeStruct((N_p, O_p), out_dtype),
        grid_spec=pltpu.PrefetchScalarGridSpec(
            num_scalar_prefetch=0,
            grid=(nt, kt),                      # reduction (hidden) axis last
            in_specs=in_specs,
            out_specs=out_spec,
            scratch_shapes=scratch,
        ),
        compiler_params=pltpu.CompilerParams(
            dimension_semantics=("parallel", "arbitrary"),
            vmem_limit_bytes=vmem_limit,
        ),
        cost_estimate=cost,
    )(xp, w1p, b1p, w2p, b2p)

    return out[:N, :O].reshape(*lead, O)


# ----------------------------- param init ---------------------------------- #

def init_mlp_params(key, in_features, hidden_features, out_features,
                    dtype=jnp.float32):
    """torch.nn.Linear default init: U[-1/sqrt(fan_in), 1/sqrt(fan_in)].
    Weights stored pre-transposed: w1 (in, hid), w2 (hid, out)."""
    k1, k2, k3, k4 = jax.random.split(key, 4)
    bound1 = 1.0 / jnp.sqrt(in_features)
    bound2 = 1.0 / jnp.sqrt(hidden_features)
    w1 = jax.random.uniform(k1, (in_features, hidden_features), jnp.float32,
                            minval=-bound1, maxval=bound1).astype(dtype)
    b1 = jax.random.uniform(k2, (1, hidden_features), jnp.float32,
                            minval=-bound1, maxval=bound1).astype(dtype)
    w2 = jax.random.uniform(k3, (hidden_features, out_features), jnp.float32,
                            minval=-bound2, maxval=bound2).astype(dtype)
    b2 = jax.random.uniform(k4, (1, out_features), jnp.float32,
                            minval=-bound2, maxval=bound2).astype(dtype)
    return w1, b1, w2, b2


# -------------------------------- main -------------------------------------- #

if __name__ == "__main__":
    key = jax.random.PRNGKey(0)
    dtype = jnp.bfloat16   # bf16 MXU operands, f32 accumulation in-kernel

    def reference(x, w1, b1, w2, b2):
        # Pure-JAX reference emulating the kernel's bf16-operand / f32-accum path.
        xf = x.reshape(-1, x.shape[-1]).astype(jnp.float32)
        h = jnp.maximum(xf @ w1.astype(jnp.float32)
                        + b1.reshape(1, -1).astype(jnp.float32), 0.0)
        h = h.astype(jnp.bfloat16).astype(jnp.float32)
        y = h @ w2.astype(jnp.float32) + b2.reshape(1, -1).astype(jnp.float32)
        return y.reshape(*x.shape[:-1], w2.shape[1])

    # --- Test 1: fused single-pass kernel (hidden fits in one tile) ---------
    batch, seq, in_f, hid_f, out_f = 2, 8, 32, 64, 32
    kx, kp = jax.random.split(key)
    x = jax.random.normal(kx, (batch, seq, in_f), jnp.float32).astype(dtype)
    w1, b1, w2, b2 = init_mlp_params(kp, in_f, hid_f, out_f, dtype=dtype)
    y = jax.block_until_ready(mlp_forward(x, w1, b1, w2, b2))
    ref = reference(x, w1, b1, w2, b2)
    assert y.shape == (batch, seq, out_f)
    err1 = jnp.max(jnp.abs(y.astype(jnp.float32) - ref))
    assert err1 < 5e-2, f"single-pass max abs error {err1}"

    # --- Test 2: hidden-tiled reduction kernel (kt > 1, f32 accumulator) ----
    hid_f2, out_f2 = 384, 64
    kx2, kp2 = jax.random.split(kp)
    x2 = jax.random.normal(kx2, (batch, seq, in_f), jnp.float32).astype(dtype)
    w1b, b1b, w2b, b2b = init_mlp_params(kp2, in_f, hid_f2, out_f2, dtype=dtype)
    y2 = jax.block_until_ready(
        mlp_forward(x2, w1b, b1b, w2b, b2b, hidden_tile=128))
    ref2 = reference(x2, w1b, b1b, w2b, b2b)
    assert y2.shape == (batch, seq, out_f2)
    err2 = jnp.max(jnp.abs(y2.astype(jnp.float32) - ref2))
    assert err2 < 5e-2, f"tiled max abs error {err2}"

    print("KERNEL_OK")
</pallas_src>

<mosaic_0001>
module attributes {stable_mosaic.version = 11 : i64} {
  func.func @_mlp_kernel_single(%arg0: i32, %arg1: i32, %arg2: memref<16x256xbf16, #tpu.memory_space<vmem>>, %arg3: memref<256x256xbf16, #tpu.memory_space<vmem>>, %arg4: memref<1x256xf32, #tpu.memory_space<vmem>>, %arg5: memref<256x256xbf16, #tpu.memory_space<vmem>>, %arg6: memref<1x256xf32, #tpu.memory_space<vmem>>, %arg7: memref<16x256xbf16, #tpu.memory_space<vmem>>) attributes {dimension_semantics = [#tpu.dimension_semantics<parallel>, #tpu.dimension_semantics<arbitrary>], iteration_bounds = array<i64: 1, 1>, scalar_prefetch = 0 : i64, scratch_operands = 0 : i64, tpu.core_type = #tpu.core_type<tc>, window_params = [{transform_indices = @transform_0, window_bounds = array<i64: 16, 256>}, {pipeline_mode = #tpu.pipeline_mode<synchronous>, transform_indices = @transform_1, window_bounds = array<i64: 256, 256>}, {pipeline_mode = #tpu.pipeline_mode<synchronous>, transform_indices = @transform_2, window_bounds = array<i64: 1, 256>}, {pipeline_mode = #tpu.pipeline_mode<synchronous>, transform_indices = @transform_3, window_bounds = array<i64: 256, 256>}, {pipeline_mode = #tpu.pipeline_mode<synchronous>, transform_indices = @transform_4, window_bounds = array<i64: 1, 256>}, {transform_indices = @transform_5, window_bounds = array<i64: 16, 256>}]} {
    %c0 = arith.constant 0 : index
    %c0_0 = arith.constant 0 : index
    %0 = vector.load %arg2[%c0, %c0_0] : memref<16x256xbf16, #tpu.memory_space<vmem>>, vector<16x256xbf16>
    %c0_1 = arith.constant 0 : index
    %c0_2 = arith.constant 0 : index
    %1 = vector.load %arg3[%c0_1, %c0_2] : memref<256x256xbf16, #tpu.memory_space<vmem>>, vector<256x256xbf16>
    %cst = arith.constant dense<0.000000e+00> : vector<16x256xf32>
    %2 = tpu.matmul %0, %1, %cst {dimension_numbers = #tpu.dot_dimension_numbers<[1], [0], [0], [1], [0, 0, 1, 1], [], []>} : vector<16x256xbf16>, vector<256x256xbf16>, vector<16x256xf32> -> vector<16x256xf32>
    %c0_3 = arith.constant 0 : index
    %c0_4 = arith.constant 0 : index
    %3 = vector.load %arg4[%c0_3, %c0_4] : memref<1x256xf32, #tpu.memory_space<vmem>>, vector<1x256xf32>
    %4 = vector.broadcast %3 : vector<1x256xf32> to vector<16x256xf32>
    %5 = arith.addf %2, %4 : vector<16x256xf32>
    %cst_5 = arith.constant 0.000000e+00 : f32
    %6 = vector.broadcast %cst_5 : f32 to vector<16x256xf32>
    %7 = arith.maximumf %5, %6 : vector<16x256xf32>
    %8 = arith.truncf %7 : vector<16x256xf32> to vector<16x256xbf16>
    %c0_6 = arith.constant 0 : index
    %c0_7 = arith.constant 0 : index
    %9 = vector.load %arg5[%c0_6, %c0_7] : memref<256x256xbf16, #tpu.memory_space<vmem>>, vector<256x256xbf16>
    %cst_8 = arith.constant dense<0.000000e+00> : vector<16x256xf32>
    %10 = tpu.matmul %8, %9, %cst_8 {dimension_numbers = #tpu.dot_dimension_numbers<[1], [0], [0], [1], [0, 0, 1, 1], [], []>} : vector<16x256xbf16>, vector<256x256xbf16>, vector<16x256xf32> -> vector<16x256xf32>
    %c0_9 = arith.constant 0 : index
    %c0_10 = arith.constant 0 : index
    %11 = vector.load %arg6[%c0_9, %c0_10] : memref<1x256xf32, #tpu.memory_space<vmem>>, vector<1x256xf32>
    %12 = vector.broadcast %11 : vector<1x256xf32> to vector<16x256xf32>
    %13 = arith.addf %10, %12 : vector<16x256xf32>
    %14 = arith.truncf %13 : vector<16x256xf32> to vector<16x256xbf16>
    %c0_11 = arith.constant 0 : index
    %c0_12 = arith.constant 0 : index
    %15 = vector.load %arg7[%c0_11, %c0_12] : memref<16x256xbf16, #tpu.memory_space<vmem>>, vector<16x256xbf16>
    tpu.vector_store %arg7[%c0_11, %c0_12], %14 {strides = array<i32>} : memref<16x256xbf16, #tpu.memory_space<vmem>>, vector<16x256xbf16>,
    return
  }
  func.func @transform_0(%arg0: i32, %arg1: i32) -> (i32, i32) {
    %c0_i32 = arith.constant 0 : i32
    %c0_i32_0 = arith.constant 0 : i32
    return %arg0, %c0_i32 : i32, i32
  }
  func.func @transform_1(%arg0: i32, %arg1: i32) -> (i32, i32) {
    %c0_i32 = arith.constant 0 : i32
    %c0_i32_0 = arith.constant 0 : i32
    return %c0_i32, %arg1 : i32, i32
  }
  func.func @transform_2(%arg0: i32, %arg1: i32) -> (i32, i32) {
    %c0_i32 = arith.constant 0 : i32
    %c0_i32_0 = arith.constant 0 : i32
    return %c0_i32, %arg1 : i32, i32
  }
  func.func @transform_3(%arg0: i32, %arg1: i32) -> (i32, i32) {
    %c0_i32 = arith.constant 0 : i32
    %c0_i32_0 = arith.constant 0 : i32
    return %arg1, %c0_i32 : i32, i32
  }
  func.func @transform_4(%arg0: i32, %arg1: i32) -> (i32, i32) {
    %c0_i32 = arith.constant 0 : i32
    %c0_i32_0 = arith.constant 0 : i32
    %c0_i32_1 = arith.constant 0 : i32
    return %c0_i32, %c0_i32_0 : i32, i32
  }
  func.func @transform_5(%arg0: i32, %arg1: i32) -> (i32, i32) {
    %c0_i32 = arith.constant 0 : i32
    %c0_i32_0 = arith.constant 0 : i32
    return %arg0, %c0_i32 : i32, i32
  }
}

</mosaic_0001>

<llo_original>
// kernel: tpu_custom_call.1
$region0: #{tpu_custom_call.1}
  #allocation0 [shape = 'u32[]', space=smem, size = 0x4, offset = 0x4, fixed_abs, tag = 'smem constant byte address 0x4 - core index']
  #allocation1 [shape = 'u32[144,128]{1,0:T(1,128)}', space=vmem, size = 0x12000, scoped, tag = 'internal scratch']
  %s0 = inlined_call_operand.hbm [shape: bf16[16,256], index: 0, kind: input, shape index: {}]
  %s1 = inlined_call_operand.hbm [shape: bf16[256,256], index: 1, kind: input, shape index: {}]
  %s2 = inlined_call_operand.vmem [shape: f32[1,256], index: 2, kind: input, shape index: {}]
  %s3 = inlined_call_operand.hbm [shape: bf16[256,256], index: 3, kind: input, shape index: {}]
  %s4 = inlined_call_operand.vmem [shape: f32[1,256], index: 4, kind: input, shape index: {}]
  %s5 = inlined_call_operand.hbm [shape: bf16[16,256], index: 5, kind: output, shape index: {}]
  %s6 = sld [smem:[#allocation0]]
  $region42: #{tpu_custom_call.1} parent=0
    _
  %s8 = ssub.s32 1, %s6
  %s9 = scalar_select 0, %s8, %s6
  $region1: #{tpu_custom_call.1} parent=0
    #allocation2 [shape = 'u8[8192]{0}', space=vmem, size = 0x2000, scoped, tag = 'input window, operand 0, single buffered']
    #allocation3 [shape = 's32[1]{0}', space=sflag, size = 0x4, scoped, tag = 'scoped memory for tpu_custom_call.1']
    #allocation4 [shape = 's32[1]{0}', space=sflag, size = 0x4, scoped, tag = 'scoped memory for tpu_custom_call.1']
    #allocation5 [shape = 'u8[131072]{0}', space=vmem, size = 0x20000, scoped, tag = 'input window, operand 1, single buffered']
    #allocation6 [shape = 's32[1]{0}', space=sflag, size = 0x4, scoped, tag = 'scoped memory for tpu_custom_call.1']
    #allocation7 [shape = 'u8[131072]{0}', space=vmem, size = 0x20000, scoped, tag = 'input window, operand 3, single buffered']
    #allocation8 [shape = 'u8[8192]{0}', space=vmem, size = 0x2000, scoped, tag = 'output window, operand 0, single buffered']
    %10 = vsyncpa [#allocation3], 0
    %11 = vsyncpa [#allocation6], 0
    %12 = vsyncpa [#allocation4], 0
    // Predicated region
    $region2: #{tpu_custom_call.1} parent=1 // pred_check
      _
    $region3: #{tpu_custom_call.1} parent=1 // pred_check_branch
      %14 = sbr.rel (0) target = $region5
    $region4: #{tpu_custom_call.1} parent=1 // pred_region
      %s16 = ssub.s32 256, 256
      %17 = vsyncadd [#allocation3], %s16
      %s18 = sshll.u32 [#allocation2], 4
      %s19 = int_to_ptr.vmem [resolvable:$true] %s18
      %24 = dma.hbm_to_vmem [thread:$0]  %s0, 256, %s19, [#allocation3], 128, 128, 8
    $region5: #{tpu_custom_call.1} parent=1 // pred_fallthru
      _
    // Predicated region
    $region6: #{tpu_custom_call.1} parent=1 // pred_check
      _
    $region7: #{tpu_custom_call.1} parent=1 // pred_check_branch
      %26 = sbr.rel (0) target = $region9
    $region8: #{tpu_custom_call.1} parent=1 // pred_region
      %s28 = ssub.s32 4096, 4096
      %29 = vsyncadd [#allocation6], %s28
      %s30 = sshll.u32 [#allocation5], 4
      %s31 = int_to_ptr.vmem [resolvable:$true] %s30
      %36 = dma.hbm_to_vmem [thread:$0]  %s1, 4096, %s31, [#allocation6], 128, 128, 8
    $region9: #{tpu_custom_call.1} parent=1 // pred_fallthru
      _
    // Predicated region
    $region10: #{tpu_custom_call.1} parent=1 // pred_check
      _
    $region11: #{tpu_custom_call.1} parent=1 // pred_check_branch
      %38 = sbr.rel (0) target = $region13
    $region12: #{tpu_custom_call.1} parent=1 // pred_region
      _
    $region13: #{tpu_custom_call.1} parent=1 // pred_fallthru
      _
    // Predicated region
    $region14: #{tpu_custom_call.1} parent=1 // pred_check
      _
    $region15: #{tpu_custom_call.1} parent=1 // pred_check_branch
      %40 = sbr.rel (0) target = $region17
    $region16: #{tpu_custom_call.1} parent=1 // pred_region
      %s42 = ssub.s32 4096, 4096
      %43 = vsyncadd [#allocation6], %s42
      %s44 = sshll.u32 [#allocation7], 4
      %s45 = int_to_ptr.vmem [resolvable:$true] %s44
      %50 = dma.hbm_to_vmem [thread:$0]  %s3, 4096, %s45, [#allocation6], 128, 128, 8
    $region17: #{tpu_custom_call.1} parent=1 // pred_fallthru
      _
    // Predicated region
    $region18: #{tpu_custom_call.1} parent=1 // pred_check
      _
    $region19: #{tpu_custom_call.1} parent=1 // pred_check_branch
      %52 = sbr.rel (0) target = $region21
    $region20: #{tpu_custom_call.1} parent=1 // pred_region
      _
    $region21: #{tpu_custom_call.1} parent=1 // pred_fallthru
      _
    // Predicated region
    $region22: #{tpu_custom_call.1} parent=1 // pred_check
      _
    $region23: #{tpu_custom_call.1} parent=1 // pred_check_branch
      %54 = sbr.rel (0) target = $region25
    $region24: #{tpu_custom_call.1} parent=1 // pred_region
      %55 = dma.done [#allocation3], 256
    $region25: #{tpu_custom_call.1} parent=1 // pred_fallthru
      _
    // Predicated region
    $region26: #{tpu_custom_call.1} parent=1 // pred_check
      _
    $region27: #{tpu_custom_call.1} parent=1 // pred_check_branch
      %57 = sbr.rel (0) target = $region29
    $region28: #{tpu_custom_call.1} parent=1 // pred_region
      %58 = dma.done [#allocation6], 4096
    $region29: #{tpu_custom_call.1} parent=1 // pred_fallthru
      _
    // Predicated region
    $region30: #{tpu_custom_call.1} parent=1 // pred_check
      _
    $region31: #{tpu_custom_call.1} parent=1 // pred_check_branch
      %60 = sbr.rel (0) target = $region33
    $region32: #{tpu_custom_call.1} parent=1 // pred_region
      %61 = dma.done [#allocation6], 4096
    $region33: #{tpu_custom_call.1} parent=1 // pred_fallthru
      _
    %v62 = vld [vmem:[#allocation2] sm:$0xff]
    %v63 = vld [vmem:[#allocation2 + $0x8] sm:$0xff]
    %v64 = vld [vmem:[#allocation5] sm:$0xff]
    %v65 = vld [vmem:[#allocation5 + $0x8] sm:$0xff]
    %v66 = vld [vmem:[#allocation5 + $0x10] sm:$0xff]
    %v67 = vld [vmem:[#allocation5 + $0x18] sm:$0xff]
    %v68 = vld [vmem:[#allocation5 + $0x20] sm:$0xff]
    %v69 = vld [vmem:[#allocation5 + $0x28] sm:$0xff]
    %v70 = vld [vmem:[#allocation5 + $0x30] sm:$0xff]
    %v71 = vld [vmem:[#allocation5 + $0x38] sm:$0xff]
    %v72 = vld [vmem:[#allocation5 + $0x40] sm:$0xff]
    %v73 = vld [vmem:[#allocation5 + $0x48] sm:$0xff]
    %v74 = vld [vmem:[#allocation5 + $0x50] sm:$0xff]
    %v75 = vld [vmem:[#allocation5 + $0x58] sm:$0xff]
    %v76 = vld [vmem:[#allocation5 + $0x60] sm:$0xff]
    %v77 = vld [vmem:[#allocation5 + $0x68] sm:$0xff]
    %v78 = vld [vmem:[#allocation5 + $0x70] sm:$0xff]
    %v79 = vld [vmem:[#allocation5 + $0x78] sm:$0xff]
    %v80 = vld [vmem:[#allocation5 + $0x80] sm:$0xff]
    %v81 = vld [vmem:[#allocation5 + $0x88] sm:$0xff]
    %v82 = vld [vmem:[#allocation5 + $0x90] sm:$0xff]
    %v83 = vld [vmem:[#allocation5 + $0x98] sm:$0xff]
    %v84 = vld [vmem:[#allocation5 + $0xa0] sm:$0xff]
    %v85 = vld [vmem:[#allocation5 + $0xa8] sm:$0xff]
    %v86 = vld [vmem:[#allocation5 + $0xb0] sm:$0xff]
    %v87 = vld [vmem:[#allocation5 + $0xb8] sm:$0xff]
    %v88 = vld [vmem:[#allocation5 + $0xc0] sm:$0xff]
    %v89 = vld [vmem:[#allocation5 + $0xc8] sm:$0xff]
    %v90 = vld [vmem:[#allocation5 + $0xd0] sm:$0xff]
    %v91 = vld [vmem:[#allocation5 + $0xd8] sm:$0xff]
    %v92 = vld [vmem:[#allocation5 + $0xe0] sm:$0xff]
    %v93 = vld [vmem:[#allocation5 + $0xe8] sm:$0xff]
    %v94 = vld [vmem:[#allocation5 + $0xf0] sm:$0xff]
    %v95 = vld [vmem:[#allocation5 + $0xf8] sm:$0xff]
    %v96 = vld [vmem:[%s2] sm:$0x3]
    %v98 = vlaneseq
    %v99 = vshrl.u32 %v98, 7
    %v100 = vsub.s32 0, %v99
    %v101 = vrot.slane %v96, %v100
    %v102 = vlaneseq
    %v103 = vshrl.u32 %v102, 7
    %v104 = vsub.s32 1, %v103
    %v105 = vrot.slane %v96, %v104
    %v110 = vunpack.c.l.b16 %v62
    %v111 = vunpack.c.h.b16 %v62
    %v112 = vunpack.c.l.b16 %v63
    %v113 = vunpack.c.h.b16 %v63
    %v114 = vpack.c.b16 %v112, %v110
    %v115 = vpack.c.b16 %v113, %v111
    %v150 = vunpack.c.l.b16 %v64
    %v151 = vunpack.c.h.b16 %v64
    %v152 = vunpack.c.l.b16 %v65
    %v153 = vunpack.c.h.b16 %v65
    %v154 = vunpack.c.l.b16 %v66
    %v155 = vunpack.c.h.b16 %v66
    %v156 = vunpack.c.l.b16 %v67
    %v157 = vunpack.c.h.b16 %v67
    %v158 = vunpack.c.l.b16 %v68
    %v159 = vunpack.c.h.b16 %v68
    %v160 = vunpack.c.l.b16 %v69
    %v161 = vunpack.c.h.b16 %v69
    %v162 = vunpack.c.l.b16 %v70
    %v163 = vunpack.c.h.b16 %v70
    %v164 = vunpack.c.l.b16 %v71
    %v165 = vunpack.c.h.b16 %v71
    %v166 = vunpack.c.l.b16 %v72
    %v167 = vunpack.c.h.b16 %v72
    %v168 = vunpack.c.l.b16 %v73
    %v169 = vunpack.c.h.b16 %v73
    %v170 = vunpack.c.l.b16 %v74
    %v171 = vunpack.c.h.b16 %v74
    %v172 = vunpack.c.l.b16 %v75
    %v173 = vunpack.c.h.b16 %v75
    %v174 = vunpack.c.l.b16 %v76
    %v175 = vunpack.c.h.b16 %v76
    %v176 = vunpack.c.l.b16 %v77
    %v177 = vunpack.c.h.b16 %v77
    %v178 = vunpack.c.l.b16 %v78
    %v179 = vunpack.c.h.b16 %v78
    %v180 = vunpack.c.l.b16 %v79
    %v181 = vunpack.c.h.b16 %v79
    %v182 = vunpack.c.l.b16 %v80
    %v183 = vunpack.c.h.b16 %v80
    %v184 = vunpack.c.l.b16 %v81
    %v185 = vunpack.c.h.b16 %v81
    %v186 = vunpack.c.l.b16 %v82
    %v187 = vunpack.c.h.b16 %v82
    %v188 = vunpack.c.l.b16 %v83
    %v189 = vunpack.c.h.b16 %v83
    %v190 = vunpack.c.l.b16 %v84
    %v191 = vunpack.c.h.b16 %v84
    %v192 = vunpack.c.l.b16 %v85
    %v193 = vunpack.c.h.b16 %v85
    %v194 = vunpack.c.l.b16 %v86
    %v195 = vunpack.c.h.b16 %v86
    %v196 = vunpack.c.l.b16 %v87
    %v197 = vunpack.c.h.b16 %v87
    %v198 = vunpack.c.l.b16 %v88
    %v199 = vunpack.c.h.b16 %v88
    %v200 = vunpack.c.l.b16 %v89
    %v201 = vunpack.c.h.b16 %v89
    %v202 = vunpack.c.l.b16 %v90
    %v203 = vunpack.c.h.b16 %v90
    %v204 = vunpack.c.l.b16 %v91
    %v205 = vunpack.c.h.b16 %v91
    %v206 = vunpack.c.l.b16 %v92
    %v207 = vunpack.c.h.b16 %v92
    %v208 = vunpack.c.l.b16 %v93
    %v209 = vunpack.c.h.b16 %v93
    %v210 = vunpack.c.l.b16 %v94
    %v211 = vunpack.c.h.b16 %v94
    %v212 = vunpack.c.l.b16 %v95
    %v213 = vunpack.c.h.b16 %v95
    %v214 = vpack.c.b16 %v152, %v150
    %v215 = vpack.c.b16 %v153, %v151
    %v216 = vpack.c.b16 %v156, %v154
    %v217 = vpack.c.b16 %v157, %v155
    %v218 = vpack.c.b16 %v160, %v158
    %v219 = vpack.c.b16 %v161, %v159
    %v220 = vpack.c.b16 %v164, %v162
    %v221 = vpack.c.b16 %v165, %v163
    %v222 = vpack.c.b16 %v168, %v166
    %v223 = vpack.c.b16 %v169, %v167
    %v224 = vpack.c.b16 %v172, %v170
    %v225 = vpack.c.b16 %v173, %v171
    %v226 = vpack.c.b16 %v176, %v174
    %v227 = vpack.c.b16 %v177, %v175
    %v228 = vpack.c.b16 %v180, %v178
    %v229 = vpack.c.b16 %v181, %v179
    %v230 = vpack.c.b16 %v184, %v182
    %v231 = vpack.c.b16 %v185, %v183
    %v232 = vpack.c.b16 %v188, %v186
    %v233 = vpack.c.b16 %v189, %v187
    %v234 = vpack.c.b16 %v192, %v190
    %v235 = vpack.c.b16 %v193, %v191
    %v236 = vpack.c.b16 %v196, %v194
    %v237 = vpack.c.b16 %v197, %v195
    %v238 = vpack.c.b16 %v200, %v198
    %v239 = vpack.c.b16 %v201, %v199
    %v240 = vpack.c.b16 %v204, %v202
    %v241 = vpack.c.b16 %v205, %v203
    %v242 = vpack.c.b16 %v208, %v206
    %v243 = vpack.c.b16 %v209, %v207
    %v244 = vpack.c.b16 %v212, %v210
    %v245 = vpack.c.b16 %v213, %v211
    %278 = vmatprep.subr.bf16.mxu0 %v229
    %279 = vmatpush1.bf16.msra.mxu0 %v228
    %280 = vmatprep.subr.bf16.mxu0 %v227
    %281 = vmatpush1.bf16.msra.mxu0 %v226
    %282 = vmatprep.subr.bf16.mxu0 %v225
    %283 = vmatpush1.bf16.msra.mxu0 %v224
    %284 = vmatprep.subr.bf16.mxu0 %v223
    %285 = vmatpush1.bf16.msra.mxu0 %v222
    %286 = vmatprep.subr.bf16.mxu0 %v221
    %287 = vmatpush1.bf16.msra.mxu0 %v220
    %288 = vmatprep.subr.bf16.mxu0 %v219
    %289 = vmatpush1.bf16.msra.mxu0 %v218
    %290 = vmatprep.subr.bf16.mxu0 %v217
    %291 = vmatpush1.bf16.msra.mxu0 %v216
    %292 = vmatprep.subr.bf16.mxu0 %v215
    %293 = vmatpush1.bf16.msra.mxu0 %v214
    %294 = vmatprep.subr.bf16.mxu0 %v245
    %295 = vmatpush2.bf16.msra.mxu0 %v244
    %296 = vmatprep.subr.bf16.mxu0 %v243
    %297 = vmatpush2.bf16.msra.mxu0 %v242
    %298 = vmatprep.subr.bf16.mxu0 %v241
    %299 = vmatpush2.bf16.msra.mxu0 %v240
    %300 = vmatprep.subr.bf16.mxu0 %v239
    %301 = vmatpush2.bf16.msra.mxu0 %v238
    %302 = vmatprep.subr.bf16.mxu0 %v237
    %303 = vmatpush2.bf16.msra.mxu0 %v236
    %304 = vmatprep.subr.bf16.mxu0 %v235
    %305 = vmatpush2.bf16.msra.mxu0 %v234
    %306 = vmatprep.subr.bf16.mxu0 %v233
    %307 = vmatpush2.bf16.msra.mxu0 %v232
    %308 = vmatprep.subr.bf16.mxu0 %v231
    %309 = vmatpush2.bf16.msra.mxu0 %v230
    %310 = vmatprep.mubr.bf16.mxu0 %v115
    %311 = vmatmul.mubr.bf16.gmra.mxu0 %v114
    %v312 = vpop.f32.mrf.mxu0
    %v313 = vadd.f32 %v101, %v312
    %v314 = vpop.f32.mrf.mxu0
    %v315 = vadd.f32 %v105, %v314
    %v316 = vpop.f32.mrf.mxu0
    %v317 = vadd.f32 %v101, %v316
    %v318 = vpop.f32.mrf.mxu0
    %v319 = vadd.f32 %v105, %v318
    %320 = vdwg.mxu0
    %v321 = vmax.f32 %v313, 0.0
    %v322 = vmax.f32 %v315, 0.0
    %v323 = vmax.f32 %v317, 0.0
    %v324 = vmax.f32 %v319, 0.0
    %v325 = vpack.c.bf16 %v323, %v321
    %v326 = vpack.c.bf16 %v324, %v322
    %v327 = vld [vmem:[#allocation7] sm:$0xff]
    %v328 = vld [vmem:[#allocation7 + $0x8] sm:$0xff]
    %v329 = vld [vmem:[#allocation7 + $0x10] sm:$0xff]
    %v330 = vld [vmem:[#allocation7 + $0x18] sm:$0xff]
    %v331 = vld [vmem:[#allocation7 + $0x20] sm:$0xff]
    %v332 = vld [vmem:[#allocation7 + $0x28] sm:$0xff]
    %v333 = vld [vmem:[#allocation7 + $0x30] sm:$0xff]
    %v334 = vld [vmem:[#allocation7 + $0x38] sm:$0xff]
    %v335 = vld [vmem:[#allocation7 + $0x40] sm:$0xff]
    %v336 = vld [vmem:[#allocation7 + $0x48] sm:$0xff]
    %v337 = vld [vmem:[#allocation7 + $0x50] sm:$0xff]
    %v338 = vld [vmem:[#allocation7 + $0x58] sm:$0xff]
    %v339 = vld [vmem:[#allocation7 + $0x60] sm:$0xff]
    %v340 = vld [vmem:[#allocation7 + $0x68] sm:$0xff]
    %v341 = vld [vmem:[#allocation7 + $0x70] sm:$0xff]
    %v342 = vld [vmem:[#allocation7 + $0x78] sm:$0xff]
    %v343 = vld [vmem:[#allocation7 + $0x80] sm:$0xff]
    %v344 = vld [vmem:[#allocation7 + $0x88] sm:$0xff]
    %v345 = vld [vmem:[#allocation7 + $0x90] sm:$0xff]
    %v346 = vld [vmem:[#allocation7 + $0x98] sm:$0xff]
    %v347 = vld [vmem:[#allocation7 + $0xa0] sm:$0xff]
    %v348 = vld [vmem:[#allocation7 + $0xa8] sm:$0xff]
    %v349 = vld [vmem:[#allocation7 + $0xb0] sm:$0xff]
    %v350 = vld [vmem:[#allocation7 + $0xb8] sm:$0xff]
    %v351 = vld [vmem:[#allocation7 + $0xc0] sm:$0xff]
    %v352 = vld [vmem:[#allocation7 + $0xc8] sm:$0xff]
    %v353 = vld [vmem:[#allocation7 + $0xd0] sm:$0xff]
    %v354 = vld [vmem:[#allocation7 + $0xd8] sm:$0xff]
    %v355 = vld [vmem:[#allocation7 + $0xe0] sm:$0xff]
    %v356 = vld [vmem:[#allocation7 + $0xe8] sm:$0xff]
    %v357 = vld [vmem:[#allocation7 + $0xf0] sm:$0xff]
    %v358 = vld [vmem:[#allocation7 + $0xf8] sm:$0xff]
    %v359 = vld [vmem:[%s4] sm:$0x3]
    %v361 = vlaneseq
    %v362 = vshrl.u32 %v361, 7
    %v363 = vsub.s32 0, %v362
    %v364 = vrot.slane %v359, %v363
    %v365 = vlaneseq
    %v366 = vshrl.u32 %v365, 7
    %v367 = vsub.s32 1, %v366
    %v368 = vrot.slane %v359, %v367
    %v403 = vunpack.c.l.b16 %v327
    %v404 = vunpack.c.h.b16 %v327
    %v405 = vunpack.c.l.b16 %v328
    %v406 = vunpack.c.h.b16 %v328
    %v407 = vunpack.c.l.b16 %v329
    %v408 = vunpack.c.h.b16 %v329
    %v409 = vunpack.c.l.b16 %v330
    %v410 = vunpack.c.h.b16 %v330
    %v411 = vunpack.c.l.b16 %v331
    %v412 = vunpack.c.h.b16 %v331
    %v413 = vunpack.c.l.b16 %v332
    %v414 = vunpack.c.h.b16 %v332
    %v415 = vunpack.c.l.b16 %v333
    %v416 = vunpack.c.h.b16 %v333
    %v417 = vunpack.c.l.b16 %v334
    %v418 = vunpack.c.h.b16 %v334
    %v419 = vunpack.c.l.b16 %v335
    %v420 = vunpack.c.h.b16 %v335
    %v421 = vunpack.c.l.b16 %v336
    %v422 = vunpack.c.h.b16 %v336
    %v423 = vunpack.c.l.b16 %v337
    %v424 = vunpack.c.h.b16 %v337
    %v425 = vunpack.c.l.b16 %v338
    %v426 = vunpack.c.h.b16 %v338
    %v427 = vunpack.c.l.b16 %v339
    %v428 = vunpack.c.h.b16 %v339
    %v429 = vunpack.c.l.b16 %v340
    %v430 = vunpack.c.h.b16 %v340
    %v431 = vunpack.c.l.b16 %v341
    %v432 = vunpack.c.h.b16 %v341
    %v433 = vunpack.c.l.b16 %v342
    %v434 = vunpack.c.h.b16 %v342
    %v435 = vunpack.c.l.b16 %v343
    %v436 = vunpack.c.h.b16 %v343
    %v437 = vunpack.c.l.b16 %v344
    %v438 = vunpack.c.h.b16 %v344
    %v439 = vunpack.c.l.b16 %v345
    %v440 = vunpack.c.h.b16 %v345
    %v441 = vunpack.c.l.b16 %v346
    %v442 = vunpack.c.h.b16 %v346
    %v443 = vunpack.c.l.b16 %v347
    %v444 = vunpack.c.h.b16 %v347
    %v445 = vunpack.c.l.b16 %v348
    %v446 = vunpack.c.h.b16 %v348
    %v447 = vunpack.c.l.b16 %v349
    %v448 = vunpack.c.h.b16 %v349
    %v449 = vunpack.c.l.b16 %v350
    %v450 = vunpack.c.h.b16 %v350
    %v451 = vunpack.c.l.b16 %v351
    %v452 = vunpack.c.h.b16 %v351
    %v453 = vunpack.c.l.b16 %v352
    %v454 = vunpack.c.h.b16 %v352
    %v455 = vunpack.c.l.b16 %v353
    %v456 = vunpack.c.h.b16 %v353
    %v457 = vunpack.c.l.b16 %v354
    %v458 = vunpack.c.h.b16 %v354
    %v459 = vunpack.c.l.b16 %v355
    %v460 = vunpack.c.h.b16 %v355
    %v461 = vunpack.c.l.b16 %v356
    %v462 = vunpack.c.h.b16 %v356
    %v463 = vunpack.c.l.b16 %v357
    %v464 = vunpack.c.h.b16 %v357
    %v465 = vunpack.c.l.b16 %v358
    %v466 = vunpack.c.h.b16 %v358
    %v467 = vpack.c.b16 %v405, %v403
    %v468 = vpack.c.b16 %v406, %v404
    %v469 = vpack.c.b16 %v409, %v407
    %v470 = vpack.c.b16 %v410, %v408
    %v471 = vpack.c.b16 %v413, %v411
    %v472 = vpack.c.b16 %v414, %v412
    %v473 = vpack.c.b16 %v417, %v415
    %v474 = vpack.c.b16 %v418, %v416
    %v475 = vpack.c.b16 %v421, %v419
    %v476 = vpack.c.b16 %v422, %v420
    %v477 = vpack.c.b16 %v425, %v423
    %v478 = vpack.c.b16 %v426, %v424
    %v479 = vpack.c.b16 %v429, %v427
    %v480 = vpack.c.b16 %v430, %v428
    %v481 = vpack.c.b16 %v433, %v431
    %v482 = vpack.c.b16 %v434, %v432
    %v483 = vpack.c.b16 %v437, %v435
    %v484 = vpack.c.b16 %v438, %v436
    %v485 = vpack.c.b16 %v441, %v439
    %v486 = vpack.c.b16 %v442, %v440
    %v487 = vpack.c.b16 %v445, %v443
    %v488 = vpack.c.b16 %v446, %v444
    %v489 = vpack.c.b16 %v449, %v447
    %v490 = vpack.c.b16 %v450, %v448
    %v491 = vpack.c.b16 %v453, %v451
    %v492 = vpack.c.b16 %v454, %v452
    %v493 = vpack.c.b16 %v457, %v455
    %v494 = vpack.c.b16 %v458, %v456
    %v495 = vpack.c.b16 %v461, %v459
    %v496 = vpack.c.b16 %v462, %v460
    %v497 = vpack.c.b16 %v465, %v463
    %v498 = vpack.c.b16 %v466, %v464
    %531 = vmatprep.subr.bf16.mxu0 %v482
    %532 = vmatpush1.bf16.msra.mxu0 %v481
    %533 = vmatprep.subr.bf16.mxu0 %v480
    %534 = vmatpush1.bf16.msra.mxu0 %v479
    %535 = vmatprep.subr.bf16.mxu0 %v478
    %536 = vmatpush1.bf16.msra.mxu0 %v477
    %537 = vmatprep.subr.bf16.mxu0 %v476
    %538 = vmatpush1.bf16.msra.mxu0 %v475
    %539 = vmatprep.subr.bf16.mxu0 %v474
    %540 = vmatpush1.bf16.msra.mxu0 %v473
    %541 = vmatprep.subr.bf16.mxu0 %v472
    %542 = vmatpush1.bf16.msra.mxu0 %v471
    %543 = vmatprep.subr.bf16.mxu0 %v470
    %544 = vmatpush1.bf16.msra.mxu0 %v469
    %545 = vmatprep.subr.bf16.mxu0 %v468
    %546 = vmatpush1.bf16.msra.mxu0 %v467
    %547 = vmatprep.subr.bf16.mxu0 %v498
    %548 = vmatpush2.bf16.msra.mxu0 %v497
    %549 = vmatprep.subr.bf16.mxu0 %v496
    %550 = vmatpush2.bf16.msra.mxu0 %v495
    %551 = vmatprep.subr.bf16.mxu0 %v494
    %552 = vmatpush2.bf16.msra.mxu0 %v493
    %553 = vmatprep.subr.bf16.mxu0 %v492
    %554 = vmatpush2.bf16.msra.mxu0 %v491
    %555 = vmatprep.subr.bf16.mxu0 %v490
    %556 = vmatpush2.bf16.msra.mxu0 %v489
    %557 = vmatprep.subr.bf16.mxu0 %v488
    %558 = vmatpush2.bf16.msra.mxu0 %v487
    %559 = vmatprep.subr.bf16.mxu0 %v486
    %560 = vmatpush2.bf16.msra.mxu0 %v485
    %561 = vmatprep.subr.bf16.mxu0 %v484
    %562 = vmatpush2.bf16.msra.mxu0 %v483
    %563 = vmatprep.mubr.bf16.mxu0 %v326
    %564 = vmatmul.mubr.bf16.gmra.mxu0 %v325
    %v565 = vpop.f32.mrf.mxu0
    %v566 = vadd.f32 %v364, %v565
    %v567 = vpop.f32.mrf.mxu0
    %v568 = vadd.f32 %v368, %v567
    %v569 = vpop.f32.mrf.mxu0
    %v570 = vadd.f32 %v364, %v569
    %v571 = vpop.f32.mrf.mxu0
    %v572 = vadd.f32 %v368, %v571
    %573 = vdwg.mxu0
    %v574 = vpack.c.bf16 %v570, %v566
    %v575 = vpack.c.bf16 %v572, %v568
    %v578 = vunpack.c.l.b16 %v574
    %v579 = vunpack.c.l.b16 %v575
    %v580 = vunpack.c.h.b16 %v574
    %v581 = vunpack.c.h.b16 %v575
    %v582 = vpack.c.b16 %v579, %v578
    %v583 = vpack.c.b16 %v581, %v580
    %586 = vst [vmem:[#allocation8] sm:$0xff] %v582
    %587 = vst [vmem:[#allocation8 + $0x8] sm:$0xff] %v583
    // Predicated region
    $region34: #{tpu_custom_call.1} parent=1 // pred_check
      _
    $region35: #{tpu_custom_call.1} parent=1 // pred_check_branch
      %589 = sbr.rel (0) target = $region37
    $region36: #{tpu_custom_call.1} parent=1 // pred_region
      %s591 = ssub.s32 256, 256
      %592 = vsyncadd [#allocation4], %s591
      %s593 = sshll.u32 [#allocation8], 4
      %s594 = int_to_ptr.vmem [resolvable:$true] %s593
      %599 = dma.vmem_to_hbm [thread:$0]  %s594, 256, %s5, [#allocation4], 128, 128, 8
    $region37: #{tpu_custom_call.1} parent=1 // pred_fallthru
      _
    // Predicated region
    $region38: #{tpu_custom_call.1} parent=1 // pred_check
      _
    $region39: #{tpu_custom_call.1} parent=1 // pred_check_branch
      %601 = sbr.rel (0) target = $region41
    $region40: #{tpu_custom_call.1} parent=1 // pred_region
      %602 = dma.done [#allocation4], 256
    $region41: #{tpu_custom_call.1} parent=1 // pred_fallthru
      _
    %603 = vsyncpa [#allocation3], 1
    %604 = vsyncpa [#allocation6], 1
    %605 = vsyncpa [#allocation4], 1

</llo_original>
